<compile_context>
chip_gen: v6e
topology: v6e:2x2x1
jax: 0.10.0
libtpu: 0.0.40
codegen_flags: <defaults>
</compile_context>

<pallas_src>
import functools
import math

import jax
import jax.numpy as jnp
from jax import lax
from jax.experimental import pallas as pl
from jax.experimental.pallas import tpu as pltpu


_GOLDEN = 0x9E3779B9          # 2^32 / golden ratio (seed mixing)
_H1 = 0x7FEB352D              # lowbias32 hash constants
_H2 = 0x846CA68B


def _hash_u32(x):
    """Well-mixed 32-bit integer hash (lowbias32). x: uint32 array."""
    x = x ^ (x >> jnp.uint32(16))
    x = x * jnp.uint32(_H1)
    x = x ^ (x >> jnp.uint32(15))
    x = x * jnp.uint32(_H2)
    x = x ^ (x >> jnp.uint32(16))
    return x


# --------------------------------------------------------------------------- #
# Kernels
# --------------------------------------------------------------------------- #
def _add_pe_kernel(x_ref, pe_ref, o_ref):
    # x_ref/o_ref: (TS, B, D) block; pe_ref: (TS, D), broadcast over batch.
    o_ref[...] = x_ref[...] + pe_ref[...][:, None, :]


def _add_pe_dropout_kernel(seed_ref, x_ref, pe_ref, o_ref, *,
                           p_drop, tile_rows, batch, feat):
    y = x_ref[...] + pe_ref[...][:, None, :]

    # Per-element counter = global linear index into the full (S, B, D) tensor,
    # so masks differ across grid tiles (seed alone would repeat per tile).
    shp = y.shape
    s_i = lax.broadcasted_iota(jnp.int32, shp, 0) + pl.program_id(0) * tile_rows
    b_i = lax.broadcasted_iota(jnp.int32, shp, 1)
    d_i = lax.broadcasted_iota(jnp.int32, shp, 2)
    lin = (s_i * batch + b_i) * feat + d_i

    seed_u = seed_ref[0].astype(jnp.uint32) * jnp.uint32(_GOLDEN)
    h = _hash_u32(lin.astype(jnp.uint32) + seed_u)

    # Top 31 bits -> uniform int in [0, 2^31); keep with prob (1 - p_drop).
    r = (h >> jnp.uint32(1)).astype(jnp.int32)
    thresh = jnp.int32(min(int(p_drop * float(1 << 31)), (1 << 31) - 1))
    keep = r >= thresh

    inv_keep = 1.0 / (1.0 - p_drop)
    scale = jnp.where(keep, jnp.float32(inv_keep), jnp.float32(0.0)).astype(y.dtype)
    o_ref[...] = (y * scale).astype(o_ref.dtype)


# --------------------------------------------------------------------------- #
# Buffer construction (same math as the torch module; assumes even in_features)
# --------------------------------------------------------------------------- #
def make_positional_encoding(max_len, in_features):
    """pe of shape (max_len, in_features); torch stores it as (max_len, 1, D)."""
    position = jnp.arange(max_len, dtype=jnp.float32)[:, None]          # (L, 1)
    div_term = jnp.exp(jnp.arange(0, in_features, 2, dtype=jnp.float32)
                       * (-math.log(10000.0) / in_features))            # (D/2,)
    ang = position * div_term                                           # (L, D/2)
    pe = jnp.zeros((max_len, in_features), dtype=jnp.float32)
    pe = pe.at[:, 0::2].set(jnp.sin(ang))
    pe = pe.at[:, 1::2].set(jnp.cos(ang))
    return pe


# --------------------------------------------------------------------------- #
# Wrapper
# --------------------------------------------------------------------------- #
def _choose_tile_rows(seq_len, batch, feat, itemsize, target_bytes=2 << 20):
    """~2 MiB blocks along the sequence; multiple of 8 (sublane) when tiled."""
    rows = target_bytes // max(1, batch * feat * itemsize)
    if rows >= seq_len:
        return seq_len                      # full seq dim -> always a legal block
    return max(8, int(rows) // 8 * 8)


def positional_encoder(x, pe, *, p_drop=0.1, training=False, seed=0):
    """x: (seq_len, batch, in_features); pe: (max_len, in_features)."""
    S, B, D = x.shape
    pe_slice = pe[:S].astype(x.dtype)                       # (S, D)

    ts = _choose_tile_rows(S, B, D, x.dtype.itemsize)
    grid = (pl.cdiv(S, ts),)

    x_spec = pl.BlockSpec((ts, B, D), lambda i, *_: (i, 0, 0))
    pe_spec = pl.BlockSpec((ts, D), lambda i, *_: (i, 0))
    o_spec = pl.BlockSpec((ts, B, D), lambda i, *_: (i, 0, 0))
    cparams = pltpu.CompilerParams(dimension_semantics=("parallel",))
    out_shape = jax.ShapeDtypeStruct((S, B, D), x.dtype)
    # TODO(synk): when x is donated by the caller, input_output_aliases could
    # alias x -> out to drop the extra full-size output allocation.

    if training and p_drop > 0.0:
        kernel = functools.partial(_add_pe_dropout_kernel, p_drop=float(p_drop),
                                   tile_rows=ts, batch=B, feat=D)
        seed_arr = jnp.asarray([seed], dtype=jnp.int32)
        return pl.pallas_call(
            kernel,
            out_shape=out_shape,
            grid_spec=pltpu.PrefetchScalarGridSpec(
                num_scalar_prefetch=1,              # dropout seed -> SMEM
                grid=grid,
                in_specs=[x_spec, pe_spec],
                out_specs=o_spec),
            compiler_params=cparams,
        )(seed_arr, x, pe_slice)

    # Eval / p_drop == 0: pure add, no seed plumbing at all.
    return pl.pallas_call(
        _add_pe_kernel,
        out_shape=out_shape,
        grid_spec=pltpu.PrefetchScalarGridSpec(
            num_scalar_prefetch=0,
            grid=grid,
            in_specs=[x_spec, pe_spec],
            out_specs=o_spec),
        compiler_params=cparams,
    )(x, pe_slice)


# --------------------------------------------------------------------------- #
# Demo / self-check
# --------------------------------------------------------------------------- #
if __name__ == "__main__":
    SEQ, BATCH, D_MODEL = 8, 2, 32
    MAX_LEN = 64
    P_DROP = 0.1

    key = jax.random.PRNGKey(0)
    x = jax.random.normal(key, (SEQ, BATCH, D_MODEL), dtype=jnp.float32)
    pe = make_positional_encoding(MAX_LEN, D_MODEL)
    ref = x + pe[:SEQ][:, None, :]

    # Eval mode: Dropout is identity -> exact match against the reference.
    out_eval = jax.block_until_ready(
        positional_encoder(x, pe, p_drop=P_DROP, training=False))
    assert out_eval.shape == (SEQ, BATCH, D_MODEL)
    assert jnp.allclose(out_eval, ref, atol=1e-5, rtol=1e-5), "eval-mode mismatch"

    # Train mode: exercises the in-kernel hash-PRNG dropout path.
    out_train = jax.block_until_ready(
        positional_encoder(x, pe, p_drop=P_DROP, training=True, seed=1234))
    assert out_train.shape == (SEQ, BATCH, D_MODEL)
    kept = out_train != 0.0                        # (test-only heuristic)
    assert jnp.allclose(
        jnp.where(kept, out_train * (1.0 - P_DROP), 0.0),
        jnp.where(kept, ref, 0.0),
        atol=1e-5, rtol=1e-5,
    ), "train-mode scaling mismatch"
    n_drop = int(jnp.sum(~kept))
    assert 0 < n_drop < int(0.5 * out_train.size), "dropout mask looks degenerate"

    print("KERNEL_OK")
</pallas_src>

<mosaic_0001>
module attributes {stable_mosaic.version = 11 : i64} {
  func.func @_add_pe_kernel(%arg0: i32, %arg1: memref<8x2x32xf32, #tpu.memory_space<vmem>>, %arg2: memref<8x32xf32, #tpu.memory_space<vmem>>, %arg3: memref<8x2x32xf32, #tpu.memory_space<vmem>>) attributes {dimension_semantics = [#tpu.dimension_semantics<parallel>], iteration_bounds = array<i64: 1>, scalar_prefetch = 0 : i64, scratch_operands = 0 : i64, tpu.core_type = #tpu.core_type<tc>, window_params = [{transform_indices = @transform_0, window_bounds = array<i64: 8, 2, 32>}, {transform_indices = @transform_1, window_bounds = array<i64: 8, 32>}, {transform_indices = @transform_2, window_bounds = array<i64: 8, 2, 32>}]} {
    %c0 = arith.constant 0 : index
    %c0_0 = arith.constant 0 : index
    %c0_1 = arith.constant 0 : index
    %0 = vector.load %arg1[%c0, %c0_0, %c0_1] : memref<8x2x32xf32, #tpu.memory_space<vmem>>, vector<8x2x32xf32>
    %c0_2 = arith.constant 0 : index
    %c0_3 = arith.constant 0 : index
    %1 = vector.load %arg2[%c0_2, %c0_3] : memref<8x32xf32, #tpu.memory_space<vmem>>, vector<8x32xf32>
    %2 = vector.shape_cast %1 : vector<8x32xf32> to vector<8x1x32xf32>
    %3 = vector.broadcast %2 : vector<8x1x32xf32> to vector<8x2x32xf32>
    %4 = arith.addf %0, %3 : vector<8x2x32xf32>
    %c0_4 = arith.constant 0 : index
    %c0_5 = arith.constant 0 : index
    %c0_6 = arith.constant 0 : index
    %5 = vector.load %arg3[%c0_4, %c0_5, %c0_6] : memref<8x2x32xf32, #tpu.memory_space<vmem>>, vector<8x2x32xf32>
    tpu.vector_store %arg3[%c0_4, %c0_5, %c0_6], %4 {strides = array<i32>} : memref<8x2x32xf32, #tpu.memory_space<vmem>>, vector<8x2x32xf32>,
    return
  }
  func.func @transform_0(%arg0: i32) -> (i32, i32, i32) {
    %c0_i32 = arith.constant 0 : i32
    %c0_i32_0 = arith.constant 0 : i32
    %c0_i32_1 = arith.constant 0 : i32
    return %arg0, %c0_i32, %c0_i32_0 : i32, i32, i32
  }
  func.func @transform_1(%arg0: i32) -> (i32, i32) {
    %c0_i32 = arith.constant 0 : i32
    %c0_i32_0 = arith.constant 0 : i32
    return %arg0, %c0_i32 : i32, i32
  }
  func.func @transform_2(%arg0: i32) -> (i32, i32, i32) {
    %c0_i32 = arith.constant 0 : i32
    %c0_i32_0 = arith.constant 0 : i32
    %c0_i32_1 = arith.constant 0 : i32
    return %arg0, %c0_i32, %c0_i32_0 : i32, i32, i32
  }
}

</mosaic_0001>

<llo_original>
// kernel: tpu_custom_call.1
$region0: #{tpu_custom_call.1}
  #allocation0 [shape = 'u32[]', space=smem, size = 0x4, offset = 0x4, fixed_abs, tag = 'smem constant byte address 0x4 - core index']
  #allocation1 [shape = 'u32[144,128]{1,0:T(1,128)}', space=vmem, size = 0x12000, scoped, tag = 'internal scratch']
  %s0 = inlined_call_operand.hbm [shape: f32[8,2,32], index: 0, kind: input, shape index: {}]
  %s1 = inlined_call_operand.hbm [shape: f32[8,32], index: 1, kind: input, shape index: {}]
  %s2 = inlined_call_operand.hbm [shape: f32[8,2,32], index: 2, kind: output, shape index: {}]
  %s3 = sld [smem:[#allocation0]]
  $region26: #{tpu_custom_call.1} parent=0
    _
  %s5 = ssub.s32 1, %s3
  %s6 = scalar_select 0, %s5, %s3
  $region1: #{tpu_custom_call.1} parent=0
    #allocation2 [shape = 'u8[8192]{0}', space=vmem, size = 0x2000, scoped, tag = 'input window, operand 0, single buffered']
    #allocation3 [shape = 's32[1]{0}', space=sflag, size = 0x4, scoped, tag = 'scoped memory for tpu_custom_call.1']
    #allocation4 [shape = 's32[1]{0}', space=sflag, size = 0x4, scoped, tag = 'scoped memory for tpu_custom_call.1']
    #allocation5 [shape = 'u8[4096]{0}', space=vmem, size = 0x1000, scoped, tag = 'input window, operand 1, single buffered']
    #allocation6 [shape = 's32[1]{0}', space=sflag, size = 0x4, scoped, tag = 'scoped memory for tpu_custom_call.1']
    #allocation7 [shape = 'u8[8192]{0}', space=vmem, size = 0x2000, scoped, tag = 'output window, operand 0, single buffered']
    %7 = vsyncpa [#allocation3], 0
    %8 = vsyncpa [#allocation6], 0
    %9 = vsyncpa [#allocation4], 0
    // Predicated region
    $region2: #{tpu_custom_call.1} parent=1 // pred_check
      _
    $region3: #{tpu_custom_call.1} parent=1 // pred_check_branch
      %11 = sbr.rel (0) target = $region5
    $region4: #{tpu_custom_call.1} parent=1 // pred_region
      %s13 = ssub.s32 256, 256
      %14 = vsyncadd [#allocation3], %s13
      %s15 = sshll.u32 [#allocation2], 4
      %s16 = int_to_ptr.vmem [resolvable:$true] %s15
      %21 = dma.hbm_to_vmem [thread:$0]  %s0, 256, %s16, [#allocation3], 32, 32, 2
    $region5: #{tpu_custom_call.1} parent=1 // pred_fallthru
      _
    // Predicated region
    $region6: #{tpu_custom_call.1} parent=1 // pred_check
      _
    $region7: #{tpu_custom_call.1} parent=1 // pred_check_branch
      %23 = sbr.rel (0) target = $region9
    $region8: #{tpu_custom_call.1} parent=1 // pred_region
      %s25 = ssub.s32 128, 128
      %26 = vsyncadd [#allocation6], %s25
      %s28 = sshll.u32 [#allocation5], 4
      %s29 = int_to_ptr.vmem [resolvable:$true] %s28
      %31 = dma.hbm_to_vmem [thread:$0]  %s1, 128, %s29, [#allocation6]
    $region9: #{tpu_custom_call.1} parent=1 // pred_fallthru
      _
    // Predicated region
    $region10: #{tpu_custom_call.1} parent=1 // pred_check
      _
    $region11: #{tpu_custom_call.1} parent=1 // pred_check_branch
      %33 = sbr.rel (0) target = $region13
    $region12: #{tpu_custom_call.1} parent=1 // pred_region
      %34 = dma.done [#allocation3], 256
    $region13: #{tpu_custom_call.1} parent=1 // pred_fallthru
      _
    // Predicated region
    $region14: #{tpu_custom_call.1} parent=1 // pred_check
      _
    $region15: #{tpu_custom_call.1} parent=1 // pred_check_branch
      %36 = sbr.rel (0) target = $region17
    $region16: #{tpu_custom_call.1} parent=1 // pred_region
      %37 = dma.done [#allocation6], 128
    $region17: #{tpu_custom_call.1} parent=1 // pred_fallthru
      _
    %v38 = vld [vmem:[#allocation2] sm:$0x3]
    %v39 = vld [vmem:[#allocation2 + $0x2] sm:$0x3]
    %v40 = vld [vmem:[#allocation2 + $0x4] sm:$0x3]
    %v41 = vld [vmem:[#allocation2 + $0x6] sm:$0x3]
    %v42 = vld [vmem:[#allocation2 + $0x8] sm:$0x3]
    %v43 = vld [vmem:[#allocation2 + $0xa] sm:$0x3]
    %v44 = vld [vmem:[#allocation2 + $0xc] sm:$0x3]
    %v45 = vld [vmem:[#allocation2 + $0xe] sm:$0x3]
    %v46 = vld [vmem:[#allocation5] sm:$0xff]
    %v48 = vcombine.high %v46, %v46
    %v50 = vunpack.c.l.s4 1966171168
    %v51 = vunpack.c.0.s8 %v50
    %v52 = vlaneseq
    %v53 = vshrl.u32 %v52, 7
    %v54 = vsub.s32 %v51, %v53
    %v55 = vrot.slane %v46, %v54
    %v57 = vunpack.c.l.s4 1966171168
    %v58 = vunpack.c.0.s8 %v57
    %v59 = vlaneseq
    %v60 = vshrl.u32 %v59, 7
    %v61 = vsub.s32 %v58, %v60
    %v62 = vrot.slane %v48, %v61
    %v63 = vcombine.high %v55, %v55
    %v64 = vcombine.high %v62, %v62
    %v66 = vunpack.c.l.s4 1966171168
    %v67 = vunpack.c.0.s8 %v66
    %v68 = vlaneseq
    %v69 = vshrl.u32 %v68, 7
    %v70 = vsub.s32 %v67, %v69
    %v71 = vrot.slane %v55, %v70
    %v73 = vunpack.c.l.s4 1966171168
    %v74 = vunpack.c.0.s8 %v73
    %v75 = vlaneseq
    %v76 = vshrl.u32 %v75, 7
    %v77 = vsub.s32 %v74, %v76
    %v78 = vrot.slane %v62, %v77
    %v80 = vunpack.c.l.s4 1966171168
    %v81 = vunpack.c.0.s8 %v80
    %v82 = vlaneseq
    %v83 = vshrl.u32 %v82, 7
    %v84 = vsub.s32 %v81, %v83
    %v85 = vrot.slane %v63, %v84
    %v87 = vunpack.c.l.s4 1966171168
    %v88 = vunpack.c.0.s8 %v87
    %v89 = vlaneseq
    %v90 = vshrl.u32 %v89, 7
    %v91 = vsub.s32 %v88, %v90
    %v92 = vrot.slane %v64, %v91
    %v93 = vcombine.high %v71, %v71
    %v94 = vcombine.high %v78, %v78
    %v95 = vcombine.high %v85, %v85
    %v96 = vcombine.high %v92, %v92
    %v97 = vlaneseq
    %v98 = vshrl.u32 %v97, 7
    %v99 = vsub.s32 0, %v98
    %v100 = vrot.slane %v71, %v99
    %v101 = vlaneseq
    %v102 = vshrl.u32 %v101, 7
    %v103 = vsub.s32 0, %v102
    %v104 = vrot.slane %v85, %v103
    %v105 = vlaneseq
    %v106 = vshrl.u32 %v105, 7
    %v107 = vsub.s32 0, %v106
    %v108 = vrot.slane %v93, %v107
    %v109 = vlaneseq
    %v110 = vshrl.u32 %v109, 7
    %v111 = vsub.s32 0, %v110
    %v112 = vrot.slane %v95, %v111
    %v113 = vlaneseq
    %v114 = vshrl.u32 %v113, 7
    %v115 = vsub.s32 0, %v114
    %v116 = vrot.slane %v78, %v115
    %v117 = vlaneseq
    %v118 = vshrl.u32 %v117, 7
    %v119 = vsub.s32 0, %v118
    %v120 = vrot.slane %v92, %v119
    %v121 = vlaneseq
    %v122 = vshrl.u32 %v121, 7
    %v123 = vsub.s32 0, %v122
    %v124 = vrot.slane %v94, %v123
    %v125 = vlaneseq
    %v126 = vshrl.u32 %v125, 7
    %v127 = vsub.s32 0, %v126
    %v128 = vrot.slane %v96, %v127
    %v137 = vadd.f32 %v38, %v100
    %v138 = vadd.f32 %v39, %v104
    %v139 = vadd.f32 %v40, %v108
    %v140 = vadd.f32 %v41, %v112
    %v141 = vadd.f32 %v42, %v116
    %v142 = vadd.f32 %v43, %v120
    %v143 = vadd.f32 %v44, %v124
    %v144 = vadd.f32 %v45, %v128
    %vm145 = vcmask 254976
    %146 = vst.msk [vmem:[#allocation7] sm:$0x3] %vm145, %v137
    %147 = vst.msk [vmem:[#allocation7 + $0x2] sm:$0x3] %vm145, %v138
    %148 = vst.msk [vmem:[#allocation7 + $0x4] sm:$0x3] %vm145, %v139
    %149 = vst.msk [vmem:[#allocation7 + $0x6] sm:$0x3] %vm145, %v140
    %150 = vst.msk [vmem:[#allocation7 + $0x8] sm:$0x3] %vm145, %v141
    %151 = vst.msk [vmem:[#allocation7 + $0xa] sm:$0x3] %vm145, %v142
    %152 = vst.msk [vmem:[#allocation7 + $0xc] sm:$0x3] %vm145, %v143
    %153 = vst.msk [vmem:[#allocation7 + $0xe] sm:$0x3] %vm145, %v144
    // Predicated region
    $region18: #{tpu_custom_call.1} parent=1 // pred_check
      _
    $region19: #{tpu_custom_call.1} parent=1 // pred_check_branch
      %155 = sbr.rel (0) target = $region21
    $region20: #{tpu_custom_call.1} parent=1 // pred_region
      %s157 = ssub.s32 256, 256
      %158 = vsyncadd [#allocation4], %s157
      %s159 = sshll.u32 [#allocation7], 4
      %s160 = int_to_ptr.vmem [resolvable:$true] %s159
      %165 = dma.vmem_to_hbm [thread:$0]  %s160, 256, %s2, [#allocation4], 32, 32, 2
    $region21: #{tpu_custom_call.1} parent=1 // pred_fallthru
      _
    // Predicated region
    $region22: #{tpu_custom_call.1} parent=1 // pred_check
      _
    $region23: #{tpu_custom_call.1} parent=1 // pred_check_branch
      %167 = sbr.rel (0) target = $region25
    $region24: #{tpu_custom_call.1} parent=1 // pred_region
      %168 = dma.done [#allocation4], 256
    $region25: #{tpu_custom_call.1} parent=1 // pred_fallthru
      _
    %169 = vsyncpa [#allocation3], 1
    %170 = vsyncpa [#allocation6], 1
    %171 = vsyncpa [#allocation4], 1

</llo_original>
